<compile_context>
chip_gen: v7x
topology: tpu7x:2x2x1
jax: 0.10.0
libtpu: 0.0.40
codegen_flags: <defaults>
</compile_context>

<pallas_src>
import jax
import jax.numpy as jnp
from jax.experimental import pallas as pl
from jax.experimental.pallas import tpu as pltpu


def _identity_kernel(x_ref, o_ref):
    # Linear.forward(logits, *args) -> logits  (s=1, m=0: no transform at all)
    o_ref[...] = x_ref[...]


def linear_softmax_head(logits, targets=None, *, vmem_budget_bytes=8 * 1024 * 1024):
    """Pallas equivalent of fastreid any_softmax.Linear.forward.

    `targets` is accepted (like the PyTorch *args) and ignored.
    """
    n, c = logits.shape
    itemsize = jnp.dtype(logits.dtype).itemsize

    # Sublane packing: 32-bit -> 8 rows/vreg, 16-bit -> 16, 8-bit -> 32.
    sublane = max(8, 32 // max(itemsize, 1))

    # Lane-dense block: full C per block (collapses the column grid axis and
    # guarantees unmasked, full-width stores).  Pick the largest row count
    # whose tile fits 1/4 of the VMEM budget (2 in + 2 out double-buffered
    # tiles live at once), rounded to the sublane packing multiple.
    bytes_per_row = max(c * itemsize, 1)
    max_rows = max(sublane, (vmem_budget_bytes // 4) // bytes_per_row)
    block_rows = min(n, max_rows)
    if block_rows < n:
        # Must be a multiple of the sublane packing when not the full dim.
        block_rows = max(sublane, (block_rows // sublane) * sublane)
        block_rows = min(block_rows, n)

    grid = (pl.cdiv(n, block_rows),)

    return pl.pallas_call(
        _identity_kernel,
        out_shape=jax.ShapeDtypeStruct((n, c), logits.dtype),
        grid=grid,
        in_specs=[pl.BlockSpec((block_rows, c), lambda i: (i, 0))],
        out_specs=pl.BlockSpec((block_rows, c), lambda i: (i, 0)),
        # Identity op: reuse the input HBM buffer for the output.
        input_output_aliases={0: 0},
        compiler_params=pltpu.CompilerParams(
            dimension_semantics=("parallel",),
        ),
    )(logits)


if __name__ == "__main__":
    # Module "parameters": num_classes / scale / margin only affect repr;
    # forward has no learned weights, so nothing to initialize beyond inputs.
    num_classes = 128
    batch = 8

    key = jax.random.PRNGKey(0)
    k_logits, k_targets = jax.random.split(key)
    logits = jax.random.normal(k_logits, (batch, num_classes), dtype=jnp.float32)
    targets = jax.random.randint(k_targets, (batch,), 0, num_classes)  # ignored

    out = linear_softmax_head(logits, targets)
    jax.block_until_ready(out)

    assert out.shape == logits.shape and out.dtype == logits.dtype
    assert jnp.array_equal(out, logits)
    print("KERNEL_OK")
</pallas_src>

<mosaic_0001>
module attributes {stable_mosaic.version = 11 : i64} {
  func.func @_identity_kernel(%arg0: i32, %arg1: memref<8x128xf32, #tpu.memory_space<vmem>>, %arg2: memref<8x128xf32, #tpu.memory_space<vmem>>) attributes {dimension_semantics = [#tpu.dimension_semantics<parallel>], iteration_bounds = array<i64: 1>, scalar_prefetch = 0 : i64, scratch_operands = 0 : i64, tpu.core_type = #tpu.core_type<tc>, window_params = [{transform_indices = @transform_0, window_bounds = array<i64: 8, 128>}, {transform_indices = @transform_1, window_bounds = array<i64: 8, 128>}]} {
    %c0 = arith.constant 0 : index
    %c0_0 = arith.constant 0 : index
    %0 = vector.load %arg1[%c0, %c0_0] : memref<8x128xf32, #tpu.memory_space<vmem>>, vector<8x128xf32>
    %c0_1 = arith.constant 0 : index
    %c0_2 = arith.constant 0 : index
    %1 = vector.load %arg2[%c0_1, %c0_2] : memref<8x128xf32, #tpu.memory_space<vmem>>, vector<8x128xf32>
    tpu.vector_store %arg2[%c0_1, %c0_2], %0 {strides = array<i32>} : memref<8x128xf32, #tpu.memory_space<vmem>>, vector<8x128xf32>,
    return
  }
  func.func @transform_0(%arg0: i32) -> (i32, i32) {
    %c0_i32 = arith.constant 0 : i32
    %c0_i32_0 = arith.constant 0 : i32
    return %arg0, %c0_i32 : i32, i32
  }
  func.func @transform_1(%arg0: i32) -> (i32, i32) {
    %c0_i32 = arith.constant 0 : i32
    %c0_i32_0 = arith.constant 0 : i32
    return %arg0, %c0_i32 : i32, i32
  }
}

</mosaic_0001>

<llo_original>
// kernel: tpu_custom_call.1
$region0: #{tpu_custom_call.1}
  #allocation0 [shape = 'u32[]', space=smem, size = 0x4, offset = 0x4, fixed_abs, tag = 'smem constant byte address 0x4 - core index']
  #allocation1 [shape = 'u32[144,128]{1,0:T(1,128)}', space=vmem, size = 0x12000, scoped, tag = 'internal scratch']
  %s0 = inlined_call_operand.hbm [shape: f32[8,128], index: 0, kind: input, shape index: {}, may-alias: {0,1}]
  %s1 = inlined_call_operand.hbm [shape: f32[8,128], index: 1, kind: output, shape index: {}, may-alias: {0,1}]
  %s2 = sld [smem:[#allocation0]]
  $region18: #{tpu_custom_call.1} parent=0
    _
  %s4 = ssub.s32 1, %s2
  %s5 = scalar_select 0, %s4, %s2
  $region1: #{tpu_custom_call.1} parent=0
    #allocation2 [shape = 'u8[4096]{0}', space=vmem, size = 0x1000, scoped, tag = 'input window, operand 0, single buffered']
    #allocation3 [shape = 's32[1]{0}', space=sflag, size = 0x4, scoped, tag = 'scoped memory for tpu_custom_call.1']
    #allocation4 [shape = 's32[1]{0}', space=sflag, size = 0x4, scoped, tag = 'scoped memory for tpu_custom_call.1']
    #allocation5 [shape = 'u8[4096]{0}', space=vmem, size = 0x1000, scoped, tag = 'output window, operand 0, single buffered']
    %6 = vsyncpa [#allocation3], 0
    %7 = vsyncpa [#allocation4], 0
    // Predicated region
    $region2: #{tpu_custom_call.1} parent=1 // pred_check
      _
    $region3: #{tpu_custom_call.1} parent=1 // pred_check_branch
      %9 = sbr.rel (0) target = $region5
    $region4: #{tpu_custom_call.1} parent=1 // pred_region
      %s11 = ssub.s32 128, 128
      %12 = vsyncadd [#allocation3], %s11
      %s14 = sshll.u32 [#allocation2], 4
      %s15 = int_to_ptr.vmem [resolvable:$true] %s14
      %17 = dma.hbm_to_vmem [thread:$0]  %s0, 128, %s15, [#allocation3]
    $region5: #{tpu_custom_call.1} parent=1 // pred_fallthru
      _
    // Predicated region
    $region6: #{tpu_custom_call.1} parent=1 // pred_check
      _
    $region7: #{tpu_custom_call.1} parent=1 // pred_check_branch
      %19 = sbr.rel (0) target = $region9
    $region8: #{tpu_custom_call.1} parent=1 // pred_region
      %20 = dma.done [#allocation3], 128
    $region9: #{tpu_custom_call.1} parent=1 // pred_fallthru
      _
    %v21 = vld [vmem:[#allocation2] sm:$0xff]
    %22 = vst [vmem:[#allocation5] sm:$0xff] %v21
    // Predicated region
    $region10: #{tpu_custom_call.1} parent=1 // pred_check
      _
    $region11: #{tpu_custom_call.1} parent=1 // pred_check_branch
      %24 = sbr.rel (0) target = $region13
    $region12: #{tpu_custom_call.1} parent=1 // pred_region
      %s26 = ssub.s32 128, 128
      %27 = vsyncadd [#allocation4], %s26
      %s29 = sshll.u32 [#allocation5], 4
      %s30 = int_to_ptr.vmem [resolvable:$true] %s29
      %32 = dma.vmem_to_hbm [thread:$0]  %s30, 128, %s1, [#allocation4]
    $region13: #{tpu_custom_call.1} parent=1 // pred_fallthru
      _
    // Predicated region
    $region14: #{tpu_custom_call.1} parent=1 // pred_check
      _
    $region15: #{tpu_custom_call.1} parent=1 // pred_check_branch
      %34 = sbr.rel (0) target = $region17
    $region16: #{tpu_custom_call.1} parent=1 // pred_region
      %35 = dma.done [#allocation4], 128
    $region17: #{tpu_custom_call.1} parent=1 // pred_fallthru
      _
    %36 = vsyncpa [#allocation3], 1
    %37 = vsyncpa [#allocation4], 1

</llo_original>
